<compile_context>
chip_gen: v7x
topology: tpu7x:2x2x1
jax: 0.10.0
libtpu: 0.0.40
codegen_flags: <defaults>
</compile_context>

<pallas_src>
import math
from functools import partial

import jax
import jax.numpy as jnp
from jax.experimental import pallas as pl
from jax.experimental.pallas import tpu as pltpu

LANE = 128
_VMEM_LIMIT = 32 * 1024 * 1024  # explicit scoped-VMEM cap, safe on v5e/v6e/v7x


def _round_up(a, b):
    return (a + b - 1) // b * b


# --------------------------------------------------------------------------
# Kernels
# --------------------------------------------------------------------------
def _agg_project_kernel(adj_ref, feat_ref, w_ref, b_ref, out_ref, acc_ref):
    """out_tile = ((adj @ feat) @ W) + b  with K-reduction over grid axis 1."""
    k = pl.program_id(1)

    @pl.when(k == 0)
    def _init():
        acc_ref[...] = jnp.zeros_like(acc_ref)

    # bf16 x bf16 -> f32 accumulate on the MXU.
    acc_ref[...] += jnp.dot(adj_ref[...], feat_ref[...],
                            preferred_element_type=jnp.float32)

    @pl.when(k == pl.num_programs(1) - 1)
    def _finalize():
        out = jnp.dot(acc_ref[...], w_ref[...],
                      preferred_element_type=jnp.float32) + b_ref[...]
        out_ref[...] = out.astype(out_ref.dtype)


def _agg_bias_kernel(adj_ref, feat_ref, b_ref, out_ref, acc_ref):
    """out_tile = (adj @ feat) + b  with K-reduction over grid axis 1."""
    k = pl.program_id(1)

    @pl.when(k == 0)
    def _init():
        acc_ref[...] = jnp.zeros_like(acc_ref)

    acc_ref[...] += jnp.dot(adj_ref[...], feat_ref[...],
                            preferred_element_type=jnp.float32)

    @pl.when(k == pl.num_programs(1) - 1)
    def _finalize():
        out_ref[...] = (acc_ref[...] + b_ref[...]).astype(out_ref.dtype)


# --------------------------------------------------------------------------
# pallas_call wrappers
# --------------------------------------------------------------------------
def _compiler_params():
    return pltpu.CompilerParams(
        dimension_semantics=("parallel", "arbitrary"),
        vmem_limit_bytes=_VMEM_LIMIT,
    )


def _aggregate_project(adj_p, feat_p, w_p, b_p, *, tm, tk):
    n_pad = adj_p.shape[0]
    fin = feat_p.shape[1]
    out_cols = w_p.shape[1]
    grid = (n_pad // tm, n_pad // tk)
    return pl.pallas_call(
        _agg_project_kernel,
        out_shape=jax.ShapeDtypeStruct((n_pad, out_cols), jnp.float32),
        grid_spec=pltpu.PrefetchScalarGridSpec(
            num_scalar_prefetch=0,
            grid=grid,
            in_specs=[
                pl.BlockSpec((tm, tk), lambda i, k: (i, k)),      # adj tile
                pl.BlockSpec((tk, fin), lambda i, k: (k, 0)),     # feat tile
                pl.BlockSpec(w_p.shape, lambda i, k: (0, 0)),     # W (resident)
                pl.BlockSpec(b_p.shape, lambda i, k: (0, 0)),     # b (resident)
            ],
            out_specs=pl.BlockSpec((tm, out_cols), lambda i, k: (i, 0)),
            scratch_shapes=[pltpu.VMEM((tm, fin), jnp.float32)],
        ),
        compiler_params=_compiler_params(),
    )(adj_p, feat_p, w_p, b_p)


def _aggregate_bias(adj_p, feat_p, b_p, *, tm, tk):
    n_pad = adj_p.shape[0]
    fin = feat_p.shape[1]
    grid = (n_pad // tm, n_pad // tk)
    return pl.pallas_call(
        _agg_bias_kernel,
        out_shape=jax.ShapeDtypeStruct((n_pad, fin), jnp.float32),
        grid_spec=pltpu.PrefetchScalarGridSpec(
            num_scalar_prefetch=0,
            grid=grid,
            in_specs=[
                pl.BlockSpec((tm, tk), lambda i, k: (i, k)),      # adj tile
                pl.BlockSpec((tk, fin), lambda i, k: (k, 0)),     # feat tile
                pl.BlockSpec(b_p.shape, lambda i, k: (0, 0)),     # b (resident)
            ],
            out_specs=pl.BlockSpec((tm, fin), lambda i, k: (i, 0)),
            scratch_shapes=[pltpu.VMEM((tm, fin), jnp.float32)],
        ),
        compiler_params=_compiler_params(),
    )(adj_p, feat_p, b_p)


# --------------------------------------------------------------------------
# Forward pass
# --------------------------------------------------------------------------
@partial(jax.jit, static_argnames=("tm", "tk"))
def gcn_forward(x, adj, w1, b1, w2, b2, *, tm=256, tk=512):
    n, f = x.shape
    hdim = w1.shape[1]
    cdim = w2.shape[1]

    # Lane-dense column padding for every stored slab (unmasked vst).
    h_cols = _round_up(hdim, LANE)
    c_cols = _round_up(cdim, LANE)

    # Row / K tile sizes: 128-aligned, clamped to the padded node count.
    n_pad = _round_up(n, LANE)
    tm = min(tm, n_pad)
    tk = min(tk, n_pad)
    n_pad = _round_up(n_pad, math.lcm(tm, tk))

    f32, bf16 = jnp.float32, jnp.bfloat16

    # Zero-padded operands. adj / aggregated features go to bf16 (exact for a
    # 0/1 adjacency; f32 accumulation in-kernel); weights & biases stay f32.
    adj_p = jnp.zeros((n_pad, n_pad), bf16).at[:n, :n].set(adj.astype(bf16))
    x_p = jnp.zeros((n_pad, f), bf16).at[:n, :].set(x.astype(bf16))
    w1_p = jnp.zeros((f, h_cols), f32).at[:, :hdim].set(w1.astype(f32))
    b1_p = jnp.zeros((1, h_cols), f32).at[:, :hdim].set(b1.astype(f32))
    w2_p = jnp.zeros((h_cols, c_cols), f32).at[:hdim, :cdim].set(w2.astype(f32))
    b2_p = jnp.zeros((1, c_cols), f32).at[:, :cdim].set(b2.astype(f32))

    # Layer 1: h = (adj @ x) @ W1 + b1   (cheap order: F < H), fully in-kernel.
    h_p = _aggregate_project(adj_p, x_p, w1_p, b1_p, tm=tm, tk=tk)

    # Layer 2: out = adj @ (h @ W2) + b2 (cheap order: C < H). The tiny H->C
    # projection is done here; the heavy N x N aggregation runs in the kernel.
    p2_p = (h_p @ w2_p).astype(bf16)
    out_p = _aggregate_bias(adj_p, p2_p, b2_p, tm=tm, tk=tk)

    return out_p[:n, :cdim]


# --------------------------------------------------------------------------
# References
# --------------------------------------------------------------------------
def gcn_reference(x, adj, w1, b1, w2, b2):
    """Exact float32 semantics of the PyTorch module."""
    h = adj @ (x @ w1) + b1
    return adj @ (h @ w2) + b2


def gcn_reference_matched(x, adj, w1, b1, w2, b2):
    """Same math with the one lossy cast the kernel performs (bf16 layer-2
    aggregation inputs); layer-1 bf16 casts are exact for 0/1 adjacency and
    small-integer features."""
    h = (adj @ x) @ w1 + b1
    p2 = (h @ w2).astype(jnp.bfloat16).astype(jnp.float32)
    return adj @ p2 + b2


if __name__ == "__main__":
    num_nodes, num_features, hidden, num_classes = 4, 2, 16, 3

    adj = jnp.array(
        [[0, 1, 1, 0], [1, 0, 1, 0], [1, 1, 0, 1], [0, 0, 1, 0]],
        dtype=jnp.float32,
    )
    x = jnp.array([[1, 2], [2, 3], [3, 4], [4, 5]], dtype=jnp.float32)

    # Deterministic parameter init (Glorot-uniform-ish), shapes per __init__.
    key = jax.random.PRNGKey(0)
    k1, k2, k3, k4 = jax.random.split(key, 4)
    s1 = (6.0 / (num_features + hidden)) ** 0.5
    s2 = (6.0 / (hidden + num_classes)) ** 0.5
    w1 = jax.random.uniform(k1, (num_features, hidden), jnp.float32, -s1, s1)
    b1 = jax.random.uniform(k2, (1, hidden), jnp.float32, -0.1, 0.1)
    w2 = jax.random.uniform(k3, (hidden, num_classes), jnp.float32, -s2, s2)
    b2 = jax.random.uniform(k4, (1, num_classes), jnp.float32, -0.1, 0.1)

    out = gcn_forward(x, adj, w1, b1, w2, b2)
    out = jax.block_until_ready(out)
    assert out.shape == (num_nodes, num_classes)

    # Tight check against a precision-matched reference (validates tiling,
    # K-accumulation, padding and bias handling).
    ref_match = gcn_reference_matched(x, adj, w1, b1, w2, b2)
    assert jnp.allclose(out, ref_match, atol=1e-3, rtol=1e-3)

    # Looser check against exact f32 module semantics (bf16 aggregation trade).
    ref_f32 = gcn_reference(x, adj, w1, b1, w2, b2)
    assert jnp.allclose(out, ref_f32, atol=1.0, rtol=5e-2)

    print("KERNEL_OK")
</pallas_src>

<mosaic_0001>
module attributes {stable_mosaic.version = 11 : i64} {
  func.func @_agg_bias_kernel(%arg0: i32, %arg1: i32, %arg2: memref<128x128xbf16, #tpu.memory_space<vmem>>, %arg3: memref<128x128xbf16, #tpu.memory_space<vmem>>, %arg4: memref<1x128xf32, #tpu.memory_space<vmem>>, %arg5: memref<128x128xf32, #tpu.memory_space<vmem>>, %arg6: memref<128x128xf32, #tpu.memory_space<vmem>>) attributes {dimension_semantics = [#tpu.dimension_semantics<parallel>, #tpu.dimension_semantics<arbitrary>], iteration_bounds = array<i64: 1, 1>, scalar_prefetch = 0 : i64, scratch_operands = 1 : i64, tpu.core_type = #tpu.core_type<tc>, window_params = [{transform_indices = @transform_0, window_bounds = array<i64: 128, 128>}, {transform_indices = @transform_1, window_bounds = array<i64: 128, 128>}, {pipeline_mode = #tpu.pipeline_mode<synchronous>, transform_indices = @transform_2, window_bounds = array<i64: 1, 128>}, {transform_indices = @transform_3, window_bounds = array<i64: 128, 128>}]} {
    %c0_i32 = arith.constant 0 : i32
    %0 = arith.cmpi eq, %arg1, %c0_i32 : i32
    %1 = arith.extui %0 : i1 to i32
    %c0_i32_0 = arith.constant 0 : i32
    %2 = arith.cmpi ne, %1, %c0_i32_0 : i32
    scf.if %2 {
      %cst_10 = arith.constant 0.000000e+00 : f32
      %12 = vector.broadcast %cst_10 : f32 to vector<128x128xf32>
      %c0_11 = arith.constant 0 : index
      %c0_12 = arith.constant 0 : index
      %13 = vector.load %arg6[%c0_11, %c0_12] : memref<128x128xf32, #tpu.memory_space<vmem>>, vector<128x128xf32>
      tpu.vector_store %arg6[%c0_11, %c0_12], %12 {strides = array<i32>} : memref<128x128xf32, #tpu.memory_space<vmem>>, vector<128x128xf32>,
    } else {
    }
    %c0 = arith.constant 0 : index
    %c0_1 = arith.constant 0 : index
    %3 = vector.load %arg6[%c0, %c0_1] : memref<128x128xf32, #tpu.memory_space<vmem>>, vector<128x128xf32>
    %c0_2 = arith.constant 0 : index
    %c0_3 = arith.constant 0 : index
    %4 = vector.load %arg2[%c0_2, %c0_3] : memref<128x128xbf16, #tpu.memory_space<vmem>>, vector<128x128xbf16>
    %c0_4 = arith.constant 0 : index
    %c0_5 = arith.constant 0 : index
    %5 = vector.load %arg3[%c0_4, %c0_5] : memref<128x128xbf16, #tpu.memory_space<vmem>>, vector<128x128xbf16>
    %cst = arith.constant dense<0.000000e+00> : vector<128x128xf32>
    %6 = tpu.matmul %4, %5, %cst {dimension_numbers = #tpu.dot_dimension_numbers<[1], [0], [0], [1], [0, 0, 1, 1], [], []>} : vector<128x128xbf16>, vector<128x128xbf16>, vector<128x128xf32> -> vector<128x128xf32>
    %7 = arith.addf %3, %6 : vector<128x128xf32>
    %c0_6 = arith.constant 0 : index
    %c0_7 = arith.constant 0 : index
    %8 = vector.load %arg6[%c0_6, %c0_7] : memref<128x128xf32, #tpu.memory_space<vmem>>, vector<128x128xf32>
    tpu.vector_store %arg6[%c0_6, %c0_7], %7 {strides = array<i32>} : memref<128x128xf32, #tpu.memory_space<vmem>>, vector<128x128xf32>,
    %c0_i32_8 = arith.constant 0 : i32
    %9 = arith.cmpi eq, %arg1, %c0_i32_8 : i32
    %10 = arith.extui %9 : i1 to i32
    %c0_i32_9 = arith.constant 0 : i32
    %11 = arith.cmpi ne, %10, %c0_i32_9 : i32
    scf.if %11 {
      %c0_10 = arith.constant 0 : index
      %c0_11 = arith.constant 0 : index
      %12 = vector.load %arg6[%c0_10, %c0_11] : memref<128x128xf32, #tpu.memory_space<vmem>>, vector<128x128xf32>
      %c0_12 = arith.constant 0 : index
      %c0_13 = arith.constant 0 : index
      %13 = vector.load %arg4[%c0_12, %c0_13] : memref<1x128xf32, #tpu.memory_space<vmem>>, vector<1x128xf32>
      %14 = vector.broadcast %13 : vector<1x128xf32> to vector<128x128xf32>
      %15 = arith.addf %12, %14 : vector<128x128xf32>
      %c0_14 = arith.constant 0 : index
      %c0_15 = arith.constant 0 : index
      %16 = vector.load %arg5[%c0_14, %c0_15] : memref<128x128xf32, #tpu.memory_space<vmem>>, vector<128x128xf32>
      tpu.vector_store %arg5[%c0_14, %c0_15], %15 {strides = array<i32>} : memref<128x128xf32, #tpu.memory_space<vmem>>, vector<128x128xf32>,
    } else {
    }
    return
  }
  func.func @transform_0(%arg0: i32, %arg1: i32) -> (i32, i32) {
    %c0_i32 = arith.constant 0 : i32
    return %arg0, %arg1 : i32, i32
  }
  func.func @transform_1(%arg0: i32, %arg1: i32) -> (i32, i32) {
    %c0_i32 = arith.constant 0 : i32
    %c0_i32_0 = arith.constant 0 : i32
    return %arg1, %c0_i32 : i32, i32
  }
  func.func @transform_2(%arg0: i32, %arg1: i32) -> (i32, i32) {
    %c0_i32 = arith.constant 0 : i32
    %c0_i32_0 = arith.constant 0 : i32
    %c0_i32_1 = arith.constant 0 : i32
    return %c0_i32, %c0_i32_0 : i32, i32
  }
  func.func @transform_3(%arg0: i32, %arg1: i32) -> (i32, i32) {
    %c0_i32 = arith.constant 0 : i32
    %c0_i32_0 = arith.constant 0 : i32
    return %arg0, %c0_i32 : i32, i32
  }
}

module attributes {stable_mosaic.version = 11 : i64} {
  func.func @_agg_project_kernel(%arg0: i32, %arg1: i32, %arg2: memref<128x128xbf16, #tpu.memory_space<vmem>>, %arg3: memref<128x2xbf16, #tpu.memory_space<vmem>>, %arg4: memref<2x128xf32, #tpu.memory_space<vmem>>, %arg5: memref<1x128xf32, #tpu.memory_space<vmem>>, %arg6: memref<128x128xf32, #tpu.memory_space<vmem>>, %arg7: memref<128x2xf32, #tpu.memory_space<vmem>>) attributes {dimension_semantics = [#tpu.dimension_semantics<parallel>, #tpu.dimension_semantics<arbitrary>], iteration_bounds = array<i64: 1, 1>, scalar_prefetch = 0 : i64, scratch_operands = 1 : i64, tpu.core_type = #tpu.core_type<tc>, window_params = [{transform_indices = @transform_0, window_bounds = array<i64: 128, 128>}, {transform_indices = @transform_1, window_bounds = array<i64: 128, 2>}, {pipeline_mode = #tpu.pipeline_mode<synchronous>, transform_indices = @transform_2, window_bounds = array<i64: 2, 128>}, {pipeline_mode = #tpu.pipeline_mode<synchronous>, transform_indices = @transform_3, window_bounds = array<i64: 1, 128>}, {transform_indices = @transform_4, window_bounds = array<i64: 128, 128>}]} {
    %c0_i32 = arith.constant 0 : i32
    %0 = arith.cmpi eq, %arg1, %c0_i32 : i32
    %1 = arith.extui %0 : i1 to i32
    %c0_i32_0 = arith.constant 0 : i32
    %2 = arith.cmpi ne, %1, %c0_i32_0 : i32
    scf.if %2 {
      %cst_10 = arith.constant 0.000000e+00 : f32
      %12 = vector.broadcast %cst_10 : f32 to vector<128x2xf32>
      %c0_11 = arith.constant 0 : index
      %c0_12 = arith.constant 0 : index
      %13 = vector.load %arg7[%c0_11, %c0_12] : memref<128x2xf32, #tpu.memory_space<vmem>>, vector<128x2xf32>
      tpu.vector_store %arg7[%c0_11, %c0_12], %12 {strides = array<i32>} : memref<128x2xf32, #tpu.memory_space<vmem>>, vector<128x2xf32>,
    } else {
    }
    %c0 = arith.constant 0 : index
    %c0_1 = arith.constant 0 : index
    %3 = vector.load %arg7[%c0, %c0_1] : memref<128x2xf32, #tpu.memory_space<vmem>>, vector<128x2xf32>
    %c0_2 = arith.constant 0 : index
    %c0_3 = arith.constant 0 : index
    %4 = vector.load %arg2[%c0_2, %c0_3] : memref<128x128xbf16, #tpu.memory_space<vmem>>, vector<128x128xbf16>
    %c0_4 = arith.constant 0 : index
    %c0_5 = arith.constant 0 : index
    %5 = vector.load %arg3[%c0_4, %c0_5] : memref<128x2xbf16, #tpu.memory_space<vmem>>, vector<128x2xbf16>
    %cst = arith.constant dense<0.000000e+00> : vector<128x2xf32>
    %6 = tpu.matmul %4, %5, %cst {dimension_numbers = #tpu.dot_dimension_numbers<[1], [0], [0], [1], [0, 0, 1, 1], [], []>} : vector<128x128xbf16>, vector<128x2xbf16>, vector<128x2xf32> -> vector<128x2xf32>
    %7 = arith.addf %3, %6 : vector<128x2xf32>
    %c0_6 = arith.constant 0 : index
    %c0_7 = arith.constant 0 : index
    %8 = vector.load %arg7[%c0_6, %c0_7] : memref<128x2xf32, #tpu.memory_space<vmem>>, vector<128x2xf32>
    tpu.vector_store %arg7[%c0_6, %c0_7], %7 {strides = array<i32>} : memref<128x2xf32, #tpu.memory_space<vmem>>, vector<128x2xf32>,
    %c0_i32_8 = arith.constant 0 : i32
    %9 = arith.cmpi eq, %arg1, %c0_i32_8 : i32
    %10 = arith.extui %9 : i1 to i32
    %c0_i32_9 = arith.constant 0 : i32
    %11 = arith.cmpi ne, %10, %c0_i32_9 : i32
    scf.if %11 {
      %c0_10 = arith.constant 0 : index
      %c0_11 = arith.constant 0 : index
      %12 = vector.load %arg7[%c0_10, %c0_11] : memref<128x2xf32, #tpu.memory_space<vmem>>, vector<128x2xf32>
      %c0_12 = arith.constant 0 : index
      %c0_13 = arith.constant 0 : index
      %13 = vector.load %arg4[%c0_12, %c0_13] : memref<2x128xf32, #tpu.memory_space<vmem>>, vector<2x128xf32>
      %cst_14 = arith.constant dense<0.000000e+00> : vector<128x128xf32>
      %14 = tpu.matmul %12, %13, %cst_14 {dimension_numbers = #tpu.dot_dimension_numbers<[1], [0], [0], [1], [0, 0, 1, 1], [], []>} : vector<128x2xf32>, vector<2x128xf32>, vector<128x128xf32> -> vector<128x128xf32>
      %c0_15 = arith.constant 0 : index
      %c0_16 = arith.constant 0 : index
      %15 = vector.load %arg5[%c0_15, %c0_16] : memref<1x128xf32, #tpu.memory_space<vmem>>, vector<1x128xf32>
      %16 = vector.broadcast %15 : vector<1x128xf32> to vector<128x128xf32>
      %17 = arith.addf %14, %16 : vector<128x128xf32>
      %c0_17 = arith.constant 0 : index
      %c0_18 = arith.constant 0 : index
      %18 = vector.load %arg6[%c0_17, %c0_18] : memref<128x128xf32, #tpu.memory_space<vmem>>, vector<128x128xf32>
      tpu.vector_store %arg6[%c0_17, %c0_18], %17 {strides = array<i32>} : memref<128x128xf32, #tpu.memory_space<vmem>>, vector<128x128xf32>,
    } else {
    }
    return
  }
  func.func @transform_0(%arg0: i32, %arg1: i32) -> (i32, i32) {
    %c0_i32 = arith.constant 0 : i32
    return %arg0, %arg1 : i32, i32
  }
  func.func @transform_1(%arg0: i32, %arg1: i32) -> (i32, i32) {
    %c0_i32 = arith.constant 0 : i32
    %c0_i32_0 = arith.constant 0 : i32
    return %arg1, %c0_i32 : i32, i32
  }
  func.func @transform_2(%arg0: i32, %arg1: i32) -> (i32, i32) {
    %c0_i32 = arith.constant 0 : i32
    %c0_i32_0 = arith.constant 0 : i32
    %c0_i32_1 = arith.constant 0 : i32
    return %c0_i32, %c0_i32_0 : i32, i32
  }
  func.func @transform_3(%arg0: i32, %arg1: i32) -> (i32, i32) {
    %c0_i32 = arith.constant 0 : i32
    %c0_i32_0 = arith.constant 0 : i32
    %c0_i32_1 = arith.constant 0 : i32
    return %c0_i32, %c0_i32_0 : i32, i32
  }
  func.func @transform_4(%arg0: i32, %arg1: i32) -> (i32, i32) {
    %c0_i32 = arith.constant 0 : i32
    %c0_i32_0 = arith.constant 0 : i32
    return %arg0, %c0_i32 : i32, i32
  }
}

</mosaic_0001>

<llo_original>
// kernel: gcn_forward.3
$region0: #{gcn_forward.3}
  #allocation0 [shape = 'u32[]', space=smem, size = 0x4, offset = 0x4, fixed_abs, tag = 'smem constant byte address 0x4 - core index']
  #allocation1 [shape = 'u32[144,128]{1,0:T(1,128)}', space=vmem, size = 0x12000, scoped, tag = 'internal scratch']
  #allocation2 [shape = 'f32[128,128]{1,0:T(8,128)}', space=vmem, size = 0x10000, scoped, tag = 'scratch operand']
  %s0 = inlined_call_operand.vmem [shape: bf16[128,128], index: 0, kind: input, shape index: {}]
  %s1 = inlined_call_operand.vmem [shape: bf16[128,128], index: 1, kind: input, shape index: {}]
  %s2 = inlined_call_operand.vmem [shape: f32[1,128], index: 2, kind: input, shape index: {}]
  %s3 = inlined_call_operand.vmem [shape: f32[128,128], index: 3, kind: output, shape index: {}]
  %s4 = sld [smem:[#allocation0]]
  $region30: #{gcn_forward.3} parent=0
    _
  %s6 = ssub.s32 1, %s4
  %s7 = scalar_select 0, %s6, %s4
  // Predicated region
  $region2: #{gcn_forward.3} parent=0 // pred_check
    _
  $region3: #{gcn_forward.3} parent=0 // pred_check_branch
    %9 = sbr.rel (0) target = $region5
  $region4: #{gcn_forward.3} parent=0 // pred_region
    _
  $region5: #{gcn_forward.3} parent=0 // pred_fallthru
    _
  // Predicated region
  $region6: #{gcn_forward.3} parent=0 // pred_check
    _
  $region7: #{gcn_forward.3} parent=0 // pred_check_branch
    %11 = sbr.rel (0) target = $region9
  $region8: #{gcn_forward.3} parent=0 // pred_region
    _
  $region9: #{gcn_forward.3} parent=0 // pred_fallthru
    _
  // Predicated region
  $region10: #{gcn_forward.3} parent=0 // pred_check
    _
  $region11: #{gcn_forward.3} parent=0 // pred_check_branch
    %13 = sbr.rel (0) target = $region13
  $region12: #{gcn_forward.3} parent=0 // pred_region
    _
  $region13: #{gcn_forward.3} parent=0 // pred_fallthru
    _
  %p15 = scmp.eq.s32.totalorder 0, 0
  // Predicated region
  $region14: #{gcn_forward.3} parent=0 // pred_check
    %p16 = pneg %p15
  $region15: #{gcn_forward.3} parent=0 // pred_check_branch
    %18 = sbr.rel (%p16) target = $region17
  $region16: #{gcn_forward.3} parent=0 // pred_region
    %19 = vst [vmem:[#allocation2] sm:$0xff] 0.0
    %20 = vst [vmem:[#allocation2 + $0x8] sm:$0xff] 0.0
    %21 = vst [vmem:[#allocation2 + $0x10] sm:$0xff] 0.0
    %22 = vst [vmem:[#allocation2 + $0x18] sm:$0xff] 0.0
    %23 = vst [vmem:[#allocation2 + $0x20] sm:$0xff] 0.0
    %24 = vst [vmem:[#allocation2 + $0x28] sm:$0xff] 0.0
    %25 = vst [vmem:[#allocation2 + $0x30] sm:$0xff] 0.0
    %26 = vst [vmem:[#allocation2 + $0x38] sm:$0xff] 0.0
    %27 = vst [vmem:[#allocation2 + $0x40] sm:$0xff] 0.0
    %28 = vst [vmem:[#allocation2 + $0x48] sm:$0xff] 0.0
    %29 = vst [vmem:[#allocation2 + $0x50] sm:$0xff] 0.0
    %30 = vst [vmem:[#allocation2 + $0x58] sm:$0xff] 0.0
    %31 = vst [vmem:[#allocation2 + $0x60] sm:$0xff] 0.0
    %32 = vst [vmem:[#allocation2 + $0x68] sm:$0xff] 0.0
    %33 = vst [vmem:[#allocation2 + $0x70] sm:$0xff] 0.0
    %34 = vst [vmem:[#allocation2 + $0x78] sm:$0xff] 0.0
  $region17: #{gcn_forward.3} parent=0 // pred_fallthru
    _
  %v35 = vld [vmem:[#allocation2] sm:$0xff]
  %v36 = vld [vmem:[#allocation2 + $0x8] sm:$0xff]
  %v37 = vld [vmem:[#allocation2 + $0x10] sm:$0xff]
  %v38 = vld [vmem:[#allocation2 + $0x18] sm:$0xff]
  %v39 = vld [vmem:[#allocation2 + $0x20] sm:$0xff]
  %v40 = vld [vmem:[#allocation2 + $0x28] sm:$0xff]
  %v41 = vld [vmem:[#allocation2 + $0x30] sm:$0xff]
  %v42 = vld [vmem:[#allocation2 + $0x38] sm:$0xff]
  %v43 = vld [vmem:[#allocation2 + $0x40] sm:$0xff]
  %v44 = vld [vmem:[#allocation2 + $0x48] sm:$0xff]
  %v45 = vld [vmem:[#allocation2 + $0x50] sm:$0xff]
  %v46 = vld [vmem:[#allocation2 + $0x58] sm:$0xff]
  %v47 = vld [vmem:[#allocation2 + $0x60] sm:$0xff]
  %v48 = vld [vmem:[#allocation2 + $0x68] sm:$0xff]
  %v49 = vld [vmem:[#allocation2 + $0x70] sm:$0xff]
  %v50 = vld [vmem:[#allocation2 + $0x78] sm:$0xff]
  %v51 = vld [vmem:[%s0] sm:$0xf]
  %v52 = vld [vmem:[%s0 + $0x4] sm:$0xf]
  %v53 = vld [vmem:[%s0 + $0x8] sm:$0xf]
  %v54 = vld [vmem:[%s0 + $0xc] sm:$0xf]
  %v55 = vld [vmem:[%s0 + $0x10] sm:$0xf]
  %v56 = vld [vmem:[%s0 + $0x14] sm:$0xf]
  %v57 = vld [vmem:[%s0 + $0x18] sm:$0xf]
  %v58 = vld [vmem:[%s0 + $0x1c] sm:$0xf]
  %v59 = vld [vmem:[%s0 + $0x20] sm:$0xf]
  %v60 = vld [vmem:[%s0 + $0x24] sm:$0xf]
  %v61 = vld [vmem:[%s0 + $0x28] sm:$0xf]
  %v62 = vld [vmem:[%s0 + $0x2c] sm:$0xf]
  %v63 = vld [vmem:[%s0 + $0x30] sm:$0xf]
  %v64 = vld [vmem:[%s0 + $0x34] sm:$0xf]
  %v65 = vld [vmem:[%s0 + $0x38] sm:$0xf]
  %v66 = vld [vmem:[%s0 + $0x3c] sm:$0xf]
  %v67 = vld [vmem:[%s1] sm:$0xf]
  %v68 = vld [vmem:[%s1 + $0x4] sm:$0xf]
  %v69 = vld [vmem:[%s1 + $0x8] sm:$0xf]
  %v70 = vld [vmem:[%s1 + $0xc] sm:$0xf]
  %v71 = vld [vmem:[%s1 + $0x10] sm:$0xf]
  %v72 = vld [vmem:[%s1 + $0x14] sm:$0xf]
  %v73 = vld [vmem:[%s1 + $0x18] sm:$0xf]
  %v74 = vld [vmem:[%s1 + $0x1c] sm:$0xf]
  %v75 = vld [vmem:[%s1 + $0x20] sm:$0xf]
  %v76 = vld [vmem:[%s1 + $0x24] sm:$0xf]
  %v77 = vld [vmem:[%s1 + $0x28] sm:$0xf]
  %v78 = vld [vmem:[%s1 + $0x2c] sm:$0xf]
  %v79 = vld [vmem:[%s1 + $0x30] sm:$0xf]
  %v80 = vld [vmem:[%s1 + $0x34] sm:$0xf]
  %v81 = vld [vmem:[%s1 + $0x38] sm:$0xf]
  %v82 = vld [vmem:[%s1 + $0x3c] sm:$0xf]
  %v99 = vunpack.c.l.b16 %v51
  %v100 = vunpack.c.l.b16 %v52
  %v101 = vunpack.c.l.b16 %v53
  %v102 = vunpack.c.l.b16 %v54
  %v103 = vunpack.c.l.b16 %v55
  %v104 = vunpack.c.l.b16 %v56
  %v105 = vunpack.c.l.b16 %v57
  %v106 = vunpack.c.l.b16 %v58
  %v107 = vunpack.c.l.b16 %v59
  %v108 = vunpack.c.l.b16 %v60
  %v109 = vunpack.c.l.b16 %v61
  %v110 = vunpack.c.l.b16 %v62
  %v111 = vunpack.c.l.b16 %v63
  %v112 = vunpack.c.l.b16 %v64
  %v113 = vunpack.c.l.b16 %v65
  %v114 = vunpack.c.l.b16 %v66
  %v115 = vpack.c.b16 %v100, %v99
  %v116 = vpack.c.b16 %v102, %v101
  %v117 = vpack.c.b16 %v104, %v103
  %v118 = vpack.c.b16 %v106, %v105
  %v119 = vpack.c.b16 %v108, %v107
  %v120 = vpack.c.b16 %v110, %v109
  %v121 = vpack.c.b16 %v112, %v111
  %v122 = vpack.c.b16 %v114, %v113
  %v147 = vunpack.c.l.b16 %v67
  %v148 = vunpack.c.l.b16 %v68
  %v149 = vunpack.c.l.b16 %v69
  %v150 = vunpack.c.l.b16 %v70
  %v151 = vunpack.c.l.b16 %v71
  %v152 = vunpack.c.l.b16 %v72
  %v153 = vunpack.c.l.b16 %v73
  %v154 = vunpack.c.l.b16 %v74
  %v155 = vunpack.c.l.b16 %v75
  %v156 = vunpack.c.l.b16 %v76
  %v157 = vunpack.c.l.b16 %v77
  %v158 = vunpack.c.l.b16 %v78
  %v159 = vunpack.c.l.b16 %v79
  %v160 = vunpack.c.l.b16 %v80
  %v161 = vunpack.c.l.b16 %v81
  %v162 = vunpack.c.l.b16 %v82
  %v163 = vpack.c.b16 %v148, %v147
  %v164 = vpack.c.b16 %v150, %v149
  %v165 = vpack.c.b16 %v152, %v151
  %v166 = vpack.c.b16 %v154, %v153
  %v167 = vpack.c.b16 %v156, %v155
  %v168 = vpack.c.b16 %v158, %v157
  %v169 = vpack.c.b16 %v160, %v159
  %v170 = vpack.c.b16 %v162, %v161
  %179 = vmatprep.subr.bf16.mxu0 0
  %180 = vmatpush1.bf16.msra.mxu0 %v163
  %181 = vmatprep.subr.bf16.mxu0 0
  %182 = vmatpush1.bf16.msra.mxu0 %v164
  %183 = vmatprep.subr.bf16.mxu0 0
  %184 = vmatpush1.bf16.msra.mxu0 %v165
  %185 = vmatprep.subr.bf16.mxu0 0
  %186 = vmatpush1.bf16.msra.mxu0 %v166
  %187 = vmatprep.subr.bf16.mxu0 0
  %188 = vmatpush1.bf16.msra.mxu0 %v167
  %189 = vmatprep.subr.bf16.mxu0 0
  %190 = vmatpush1.bf16.msra.mxu0 %v168
  %191 = vmatprep.subr.bf16.mxu0 0
  %192 = vmatpush1.bf16.msra.mxu0 %v169
  %193 = vmatprep.subr.bf16.mxu0 0
  %194 = vmatpush1.bf16.msra.mxu0 %v170
  %195 = vmatprep.subr.bf16.mxu0 0
  %196 = vmatpush1.bf16.msra.mxu0 0
  %197 = vmatprep.subr.bf16.mxu0 0
  %198 = vmatpush1.bf16.msra.mxu0 0
  %199 = vmatprep.subr.bf16.mxu0 0
  %200 = vmatpush1.bf16.msra.mxu0 0
  %201 = vmatprep.subr.bf16.mxu0 0
  %202 = vmatpush1.bf16.msra.mxu0 0
  %203 = vmatprep.subr.bf16.mxu0 0
  %204 = vmatpush1.bf16.msra.mxu0 0
  %205 = vmatprep.subr.bf16.mxu0 0
  %206 = vmatpush1.bf16.msra.mxu0 0
  %207 = vmatprep.subr.bf16.mxu0 0
  %208 = vmatpush1.bf16.msra.mxu0 0
  %209 = vmatprep.subr.bf16.mxu0 0
  %210 = vmatpush1.bf16.msra.mxu0 0
  %211 = vmatprep.mubr.bf16.mxu0 0
  %212 = vmatmul.mubr.bf16.gmra.mrb[0].mxu0 %v115
  %v213 = vpop.f32.mrb[0].mxu0
  %v214 = vadd.f32 0.0, %v213
  %v215 = vpop.f32.mrb[0].mxu0
  %v216 = vpop.f32.mrb[0].mxu0
  %v217 = vadd.f32 0.0, %v216
  %v218 = vpop.f32.mrb[0].mxu0
  %219 = vmatprep.mubr.bf16.mxu0 0
  %220 = vmatmul.mubr.bf16.gmra.mrb[0].mxu0 %v116
  %v221 = vpop.f32.mrb[0].mxu0
  %v222 = vadd.f32 0.0, %v221
  %v223 = vpop.f32.mrb[0].mxu0
  %v224 = vpop.f32.mrb[0].mxu0
  %v225 = vadd.f32 0.0, %v224
  %v226 = vpop.f32.mrb[0].mxu0
  %227 = vmatprep.mubr.bf16.mxu0 0
  %228 = vmatmul.mubr.bf16.gmra.mrb[0].mxu0 %v117
  %v229 = vpop.f32.mrb[0].mxu0
  %v230 = vadd.f32 0.0, %v229
  %v231 = vpop.f32.mrb[0].mxu0
  %v232 = vpop.f32.mrb[0].mxu0
  %v233 = vadd.f32 0.0, %v232
  %v234 = vpop.f32.mrb[0].mxu0
  %235 = vmatprep.mubr.bf16.mxu0 0
  %236 = vmatmul.mubr.bf16.gmra.mrb[0].mxu0 %v118
  %v237 = vpop.f32.mrb[0].mxu0
  %v238 = vadd.f32 0.0, %v237
  %v239 = vpop.f32.mrb[0].mxu0
  %v240 = vpop.f32.mrb[0].mxu0
  %v241 = vadd.f32 0.0, %v240
  %v242 = vpop.f32.mrb[0].mxu0
  %243 = vmatprep.mubr.bf16.mxu0 0
  %244 = vmatmul.mubr.bf16.gmra.mrb[0].mxu0 %v119
  %v245 = vpop.f32.mrb[0].mxu0
  %v246 = vadd.f32 0.0, %v245
  %v247 = vpop.f32.mrb[0].mxu0
  %v248 = vpop.f32.mrb[0].mxu0
  %v249 = vadd.f32 0.0, %v248
  %v250 = vpop.f32.mrb[0].mxu0
  %251 = vmatprep.mubr.bf16.mxu0 0
  %252 = vmatmul.mubr.bf16.gmra.mrb[0].mxu0 %v120
  %v253 = vpop.f32.mrb[0].mxu0
  %v254 = vadd.f32 0.0, %v253
  %v255 = vpop.f32.mrb[0].mxu0
  %v256 = vpop.f32.mrb[0].mxu0
  %v257 = vadd.f32 0.0, %v256
  %v258 = vpop.f32.mrb[0].mxu0
  %259 = vmatprep.mubr.bf16.mxu0 0
  %260 = vmatmul.mubr.bf16.gmra.mrb[0].mxu0 %v121
  %v261 = vpop.f32.mrb[0].mxu0
  %v262 = vadd.f32 0.0, %v261
  %v263 = vpop.f32.mrb[0].mxu0
  %v264 = vpop.f32.mrb[0].mxu0
  %v265 = vadd.f32 0.0, %v264
  %v266 = vpop.f32.mrb[0].mxu0
  %267 = vmatprep.mubr.bf16.mxu0 0
  %268 = vmatmul.mubr.bf16.gmra.mrb[0].mxu0 %v122
  %v269 = vpop.f32.mrb[0].mxu0
  %v270 = vadd.f32 0.0, %v269
  %v271 = vpop.f32.mrb[0].mxu0
  %v272 = vpop.f32.mrb[0].mxu0
  %v273 = vadd.f32 0.0, %v272
  %v274 = vpop.f32.mrb[0].mxu0
  %275 = vdwg.mxu0
  %v276 = vadd.f32 %v35, %v214
  %v277 = vadd.f32 %v36, %v217
  %v278 = vadd.f32 %v37, %v222
  %v279 = vadd.f32 %v38, %v225
  %v280 = vadd.f32 %v39, %v230
  %v281 = vadd.f32 %v40, %v233
  %v282 = vadd.f32 %v41, %v238
  %v283 = vadd.f32 %v42, %v241
  %v284 = vadd.f32 %v43, %v246
  %v285 = vadd.f32 %v44, %v249
  %v286 = vadd.f32 %v45, %v254
  %v287 = vadd.f32 %v46, %v257
  %v288 = vadd.f32 %v47, %v262
  %v289 = vadd.f32 %v48, %v265
  %v290 = vadd.f32 %v49, %v270
  %v291 = vadd.f32 %v50, %v273
  %292 = vst [vmem:[#allocation2] sm:$0xff] %v276
  %293 = vst [vmem:[#allocation2 + $0x8] sm:$0xff] %v277
  %294 = vst [vmem:[#allocation2 + $0x10] sm:$0xff] %v278
  %295 = vst [vmem:[#allocation2 + $0x18] sm:$0xff] %v279
  %296 = vst [vmem:[#allocation2 + $0x20] sm:$0xff] %v280
  %297 = vst [vmem:[#allocation2 + $0x28] sm:$0xff] %v281
  %298 = vst [vmem:[#allocation2 + $0x30] sm:$0xff] %v282
  %299 = vst [vmem:[#allocation2 + $0x38] sm:$0xff] %v283
  %300 = vst [vmem:[#allocation2 + $0x40] sm:$0xff] %v284
  %301 = vst [vmem:[#allocation2 + $0x48] sm:$0xff] %v285
  %302 = vst [vmem:[#allocation2 + $0x50] sm:$0xff] %v286
  %303 = vst [vmem:[#allocation2 + $0x58] sm:$0xff] %v287
  %304 = vst [vmem:[#allocation2 + $0x60] sm:$0xff] %v288
  %305 = vst [vmem:[#allocation2 + $0x68] sm:$0xff] %v289
  %306 = vst [vmem:[#allocation2 + $0x70] sm:$0xff] %v290
  %307 = vst [vmem:[#allocation2 + $0x78] sm:$0xff] %v291
  // Predicated region
  $region18: #{gcn_forward.3} parent=0 // pred_check
    %p308 = pneg %p15
  $region19: #{gcn_forward.3} parent=0 // pred_check_branch
    %310 = sbr.rel (%p308) target = $region21
  $region20: #{gcn_forward.3} parent=0 // pred_region
    %v311 = vld [vmem:[#allocation2] sm:$0xff]
    %v312 = vld [vmem:[#allocation2 + $0x8] sm:$0xff]
    %v313 = vld [vmem:[#allocation2 + $0x10] sm:$0xff]
    %v314 = vld [vmem:[#allocation2 + $0x18] sm:$0xff]
    %v315 = vld [vmem:[#allocation2 + $0x20] sm:$0xff]
    %v316 = vld [vmem:[#allocation2 + $0x28] sm:$0xff]
    %v317 = vld [vmem:[#allocation2 + $0x30] sm:$0xff]
    %v318 = vld [vmem:[#allocation2 + $0x38] sm:$0xff]
    %v319 = vld [vmem:[#allocation2 + $0x40] sm:$0xff]
    %v320 = vld [vmem:[#allocation2 + $0x48] sm:$0xff]
    %v321 = vld [vmem:[#allocation2 + $0x50] sm:$0xff]
    %v322 = vld [vmem:[#allocation2 + $0x58] sm:$0xff]
    %v323 = vld [vmem:[#allocation2 + $0x60] sm:$0xff]
    %v324 = vld [vmem:[#allocation2 + $0x68] sm:$0xff]
    %v325 = vld [vmem:[#allocation2 + $0x70] sm:$0xff]
    %v326 = vld [vmem:[#allocation2 + $0x78] sm:$0xff]
    %v327 = vld [vmem:[%s2] sm:$0x1]
    %v329 = vlaneseq
    %v330 = vshrl.u32 %v329, 7
    %v331 = vsub.s32 0, %v330
    %v332 = vrot.slane %v327, %v331
    %v334 = vadd.f32 %v311, %v332
    %v335 = vadd.f32 %v312, %v332
    %v336 = vadd.f32 %v313, %v332
    %v337 = vadd.f32 %v314, %v332
    %v338 = vadd.f32 %v315, %v332
    %v339 = vadd.f32 %v316, %v332
    %v340 = vadd.f32 %v317, %v332
    %v341 = vadd.f32 %v318, %v332
    %v342 = vadd.f32 %v319, %v332
    %v343 = vadd.f32 %v320, %v332
    %v344 = vadd.f32 %v321, %v332
    %v345 = vadd.f32 %v322, %v332
    %v346 = vadd.f32 %v323, %v332
    %v347 = vadd.f32 %v324, %v332
    %v348 = vadd.f32 %v325, %v332
    %v349 = vadd.f32 %v326, %v332
    %350 = vst [vmem:[%s3] sm:$0xff] %v334
    %351 = vst [vmem:[%s3 + $0x8] sm:$0xff] %v335
    %352 = vst [vmem:[%s3 + $0x10] sm:$0xff] %v336
    %353 = vst [vmem:[%s3 + $0x18] sm:$0xff] %v337
    %354 = vst [vmem:[%s3 + $0x20] sm:$0xff] %v338
    %355 = vst [vmem:[%s3 + $0x28] sm:$0xff] %v339
    %356 = vst [vmem:[%s3 + $0x30] sm:$0xff] %v340
    %357 = vst [vmem:[%s3 + $0x38] sm:$0xff] %v341
    %358 = vst [vmem:[%s3 + $0x40] sm:$0xff] %v342
    %359 = vst [vmem:[%s3 + $0x48] sm:$0xff] %v343
    %360 = vst [vmem:[%s3 + $0x50] sm:$0xff] %v344
    %361 = vst [vmem:[%s3 + $0x58] sm:$0xff] %v345
    %362 = vst [vmem:[%s3 + $0x60] sm:$0xff] %v346
    %363 = vst [vmem:[%s3 + $0x68] sm:$0xff] %v347
    %364 = vst [vmem:[%s3 + $0x70] sm:$0xff] %v348
    %365 = vst [vmem:[%s3 + $0x78] sm:$0xff] %v349
  $region21: #{gcn_forward.3} parent=0 // pred_fallthru
    _
  // Predicated region
  $region22: #{gcn_forward.3} parent=0 // pred_check
    _
  $region23: #{gcn_forward.3} parent=0 // pred_check_branch
    %367 = sbr.rel (0) target = $region25
  $region24: #{gcn_forward.3} parent=0 // pred_region
    _
  $region25: #{gcn_forward.3} parent=0 // pred_fallthru
    _
  // Predicated region
  $region26: #{gcn_forward.3} parent=0 // pred_check
    _
  $region27: #{gcn_forward.3} parent=0 // pred_check_branch
    %369 = sbr.rel (0) target = $region29
  $region28: #{gcn_forward.3} parent=0 // pred_region
    _
  $region29: #{gcn_forward.3} parent=0 // pred_fallthru
    _

// kernel: gcn_forward.2
$region0: #{gcn_forward.2}
  #allocation0 [shape = 'u32[]', space=smem, size = 0x4, offset = 0x4, fixed_abs, tag = 'smem constant byte address 0x4 - core index']
  #allocation1 [shape = 'u32[144,128]{1,0:T(1,128)}', space=vmem, size = 0x12000, scoped, tag = 'internal scratch']
  #allocation2 [shape = 'f32[128,2]{1,0:T(8,128)}', space=vmem, size = 0x10000, scoped, tag = 'scratch operand']
  %s0 = inlined_call_operand.vmem [shape: bf16[128,128], index: 0, kind: input, shape index: {}]
  %s1 = inlined_call_operand.vmem [shape: bf16[128,2], index: 1, kind: input, shape index: {}]
  %s2 = inlined_call_operand.vmem [shape: f32[2,128], index: 2, kind: input, shape index: {}]
  %s3 = inlined_call_operand.vmem [shape: f32[1,128], index: 3, kind: input, shape index: {}]
  %s4 = inlined_call_operand.vmem [shape: f32[128,128], index: 4, kind: output, shape index: {}]
  %s5 = sld [smem:[#allocation0]]
  $region34: #{gcn_forward.2} parent=0
    _
  %s7 = ssub.s32 1, %s5
  %s8 = scalar_select 0, %s7, %s5
  // Predicated region
  $region2: #{gcn_forward.2} parent=0 // pred_check
    _
  $region3: #{gcn_forward.2} parent=0 // pred_check_branch
    %10 = sbr.rel (0) target = $region5
  $region4: #{gcn_forward.2} parent=0 // pred_region
    _
  $region5: #{gcn_forward.2} parent=0 // pred_fallthru
    _
  // Predicated region
  $region6: #{gcn_forward.2} parent=0 // pred_check
    _
  $region7: #{gcn_forward.2} parent=0 // pred_check_branch
    %12 = sbr.rel (0) target = $region9
  $region8: #{gcn_forward.2} parent=0 // pred_region
    _
  $region9: #{gcn_forward.2} parent=0 // pred_fallthru
    _
  // Predicated region
  $region10: #{gcn_forward.2} parent=0 // pred_check
    _
  $region11: #{gcn_forward.2} parent=0 // pred_check_branch
    %14 = sbr.rel (0) target = $region13
  $region12: #{gcn_forward.2} parent=0 // pred_region
    _
  $region13: #{gcn_forward.2} parent=0 // pred_fallthru
    _
  // Predicated region
  $region14: #{gcn_forward.2} parent=0 // pred_check
    _
  $region15: #{gcn_forward.2} parent=0 // pred_check_branch
    %16 = sbr.rel (0) target = $region17
  $region16: #{gcn_forward.2} parent=0 // pred_region
    _
  $region17: #{gcn_forward.2} parent=0 // pred_fallthru
    _
  %p18 = scmp.eq.s32.totalorder 0, 0
  // Predicated region
  $region18: #{gcn_forward.2} parent=0 // pred_check
    %p19 = pneg %p18
  $region19: #{gcn_forward.2} parent=0 // pred_check_branch
    %21 = sbr.rel (%p19) target = $region21
  $region20: #{gcn_forward.2} parent=0 // pred_region
    %vm22 = vcmask 15360
    %23 = vst.msk [vmem:[#allocation2] sm:$0xff] %vm22, 0.0
    %24 = vst.msk [vmem:[#allocation2 + $0x8] sm:$0xff] %vm22, 0.0
    %25 = vst.msk [vmem:[#allocation2 + $0x10] sm:$0xff] %vm22, 0.0
    %26 = vst.msk [vmem:[#allocation2 + $0x18] sm:$0xff] %vm22, 0.0
    %27 = vst.msk [vmem:[#allocation2 + $0x20] sm:$0xff] %vm22, 0.0
    %28 = vst.msk [vmem:[#allocation2 + $0x28] sm:$0xff] %vm22, 0.0
    %29 = vst.msk [vmem:[#allocation2 + $0x30] sm:$0xff] %vm22, 0.0
    %30 = vst.msk [vmem:[#allocation2 + $0x38] sm:$0xff] %vm22, 0.0
    %31 = vst.msk [vmem:[#allocation2 + $0x40] sm:$0xff] %vm22, 0.0
    %32 = vst.msk [vmem:[#allocation2 + $0x48] sm:$0xff] %vm22, 0.0
    %33 = vst.msk [vmem:[#allocation2 + $0x50] sm:$0xff] %vm22, 0.0
    %34 = vst.msk [vmem:[#allocation2 + $0x58] sm:$0xff] %vm22, 0.0
    %35 = vst.msk [vmem:[#allocation2 + $0x60] sm:$0xff] %vm22, 0.0
    %36 = vst.msk [vmem:[#allocation2 + $0x68] sm:$0xff] %vm22, 0.0
    %37 = vst.msk [vmem:[#allocation2 + $0x70] sm:$0xff] %vm22, 0.0
    %38 = vst.msk [vmem:[#allocation2 + $0x78] sm:$0xff] %vm22, 0.0
  $region21: #{gcn_forward.2} parent=0 // pred_fallthru
    _
  %v39 = vld [vmem:[#allocation2] sm:$0xff]
  %v40 = vld [vmem:[#allocation2 + $0x8] sm:$0xff]
  %v41 = vld [vmem:[#allocation2 + $0x10] sm:$0xff]
  %v42 = vld [vmem:[#allocation2 + $0x18] sm:$0xff]
  %v43 = vld [vmem:[#allocation2 + $0x20] sm:$0xff]
  %v44 = vld [vmem:[#allocation2 + $0x28] sm:$0xff]
  %v45 = vld [vmem:[#allocation2 + $0x30] sm:$0xff]
  %v46 = vld [vmem:[#allocation2 + $0x38] sm:$0xff]
  %v47 = vld [vmem:[#allocation2 + $0x40] sm:$0xff]
  %v48 = vld [vmem:[#allocation2 + $0x48] sm:$0xff]
  %v49 = vld [vmem:[#allocation2 + $0x50] sm:$0xff]
  %v50 = vld [vmem:[#allocation2 + $0x58] sm:$0xff]
  %v51 = vld [vmem:[#allocation2 + $0x60] sm:$0xff]
  %v52 = vld [vmem:[#allocation2 + $0x68] sm:$0xff]
  %v53 = vld [vmem:[#allocation2 + $0x70] sm:$0xff]
  %v54 = vld [vmem:[#allocation2 + $0x78] sm:$0xff]
  %v55 = vld [vmem:[%s0] sm:$0xf]
  %v56 = vld [vmem:[%s0 + $0x4] sm:$0xf]
  %v57 = vld [vmem:[%s0 + $0x8] sm:$0xf]
  %v58 = vld [vmem:[%s0 + $0xc] sm:$0xf]
  %v59 = vld [vmem:[%s0 + $0x10] sm:$0xf]
  %v60 = vld [vmem:[%s0 + $0x14] sm:$0xf]
  %v61 = vld [vmem:[%s0 + $0x18] sm:$0xf]
  %v62 = vld [vmem:[%s0 + $0x1c] sm:$0xf]
  %v63 = vld [vmem:[%s0 + $0x20] sm:$0xf]
  %v64 = vld [vmem:[%s0 + $0x24] sm:$0xf]
  %v65 = vld [vmem:[%s0 + $0x28] sm:$0xf]
  %v66 = vld [vmem:[%s0 + $0x2c] sm:$0xf]
  %v67 = vld [vmem:[%s0 + $0x30] sm:$0xf]
  %v68 = vld [vmem:[%s0 + $0x34] sm:$0xf]
  %v69 = vld [vmem:[%s0 + $0x38] sm:$0xf]
  %v70 = vld [vmem:[%s0 + $0x3c] sm:$0xf]
  %v71 = vld [vmem:[%s1] sm:$0xf]
  %v72 = vld [vmem:[%s1 + $0x4] sm:$0xf]
  %v73 = vld [vmem:[%s1 + $0x8] sm:$0xf]
  %v74 = vld [vmem:[%s1 + $0xc] sm:$0xf]
  %v75 = vld [vmem:[%s1 + $0x10] sm:$0xf]
  %v76 = vld [vmem:[%s1 + $0x14] sm:$0xf]
  %v77 = vld [vmem:[%s1 + $0x18] sm:$0xf]
  %v78 = vld [vmem:[%s1 + $0x1c] sm:$0xf]
  %v79 = vld [vmem:[%s1 + $0x20] sm:$0xf]
  %v80 = vld [vmem:[%s1 + $0x24] sm:$0xf]
  %v81 = vld [vmem:[%s1 + $0x28] sm:$0xf]
  %v82 = vld [vmem:[%s1 + $0x2c] sm:$0xf]
  %v83 = vld [vmem:[%s1 + $0x30] sm:$0xf]
  %v84 = vld [vmem:[%s1 + $0x34] sm:$0xf]
  %v85 = vld [vmem:[%s1 + $0x38] sm:$0xf]
  %v86 = vld [vmem:[%s1 + $0x3c] sm:$0xf]
  %v103 = vunpack.c.l.b16 %v55
  %v104 = vunpack.c.l.b16 %v56
  %v105 = vunpack.c.l.b16 %v57
  %v106 = vunpack.c.l.b16 %v58
  %v107 = vunpack.c.l.b16 %v59
  %v108 = vunpack.c.l.b16 %v60
  %v109 = vunpack.c.l.b16 %v61
  %v110 = vunpack.c.l.b16 %v62
  %v111 = vunpack.c.l.b16 %v63
  %v112 = vunpack.c.l.b16 %v64
  %v113 = vunpack.c.l.b16 %v65
  %v114 = vunpack.c.l.b16 %v66
  %v115 = vunpack.c.l.b16 %v67
  %v116 = vunpack.c.l.b16 %v68
  %v117 = vunpack.c.l.b16 %v69
  %v118 = vunpack.c.l.b16 %v70
  %v119 = vpack.c.b16 %v104, %v103
  %v120 = vpack.c.b16 %v106, %v105
  %v121 = vpack.c.b16 %v108, %v107
  %v122 = vpack.c.b16 %v110, %v109
  %v123 = vpack.c.b16 %v112, %v111
  %v124 = vpack.c.b16 %v114, %v113
  %v125 = vpack.c.b16 %v116, %v115
  %v126 = vpack.c.b16 %v118, %v117
  %v151 = vunpack.c.l.b16 %v71
  %v152 = vunpack.c.l.b16 %v72
  %v153 = vunpack.c.l.b16 %v73
  %v154 = vunpack.c.l.b16 %v74
  %v155 = vunpack.c.l.b16 %v75
  %v156 = vunpack.c.l.b16 %v76
  %v157 = vunpack.c.l.b16 %v77
  %v158 = vunpack.c.l.b16 %v78
  %v159 = vunpack.c.l.b16 %v79
  %v160 = vunpack.c.l.b16 %v80
  %v161 = vunpack.c.l.b16 %v81
  %v162 = vunpack.c.l.b16 %v82
  %v163 = vunpack.c.l.b16 %v83
  %v164 = vunpack.c.l.b16 %v84
  %v165 = vunpack.c.l.b16 %v85
  %v166 = vunpack.c.l.b16 %v86
  %v167 = vpack.c.b16 %v152, %v151
  %v168 = vpack.c.b16 %v154, %v153
  %v169 = vpack.c.b16 %v156, %v155
  %v170 = vpack.c.b16 %v158, %v157
  %v171 = vpack.c.b16 %v160, %v159
  %v172 = vpack.c.b16 %v162, %v161
  %v173 = vpack.c.b16 %v164, %v163
  %v174 = vpack.c.b16 %v166, %v165
  %183 = vmatprep.subr.bf16.mxu0 0
  %184 = vmatpush1.bf16.msra.mxu0 %v167
  %185 = vmatprep.subr.bf16.mxu0 0
  %186 = vmatpush1.bf16.msra.mxu0 %v168
  %187 = vmatprep.subr.bf16.mxu0 0
  %188 = vmatpush1.bf16.msra.mxu0 %v169
  %189 = vmatprep.subr.bf16.mxu0 0
  %190 = vmatpush1.bf16.msra.mxu0 %v170
  %191 = vmatprep.subr.bf16.mxu0 0
  %192 = vmatpush1.bf16.msra.mxu0 %v171
  %193 = vmatprep.subr.bf16.mxu0 0
  %194 = vmatpush1.bf16.msra.mxu0 %v172
  %195 = vmatprep.subr.bf16.mxu0 0
  %196 = vmatpush1.bf16.msra.mxu0 %v173
  %197 = vmatprep.subr.bf16.mxu0 0
  %198 = vmatpush1.bf16.msra.mxu0 %v174
  %199 = vmatprep.subr.bf16.mxu0 0
  %200 = vmatpush1.bf16.msra.mxu0 0
  %201 = vmatprep.subr.bf16.mxu0 0
  %202 = vmatpush1.bf16.msra.mxu0 0
  %203 = vmatprep.subr.bf16.mxu0 0
  %204 = vmatpush1.bf16.msra.mxu0 0
  %205 = vmatprep.subr.bf16.mxu0 0
  %206 = vmatpush1.bf16.msra.mxu0 0
  %207 = vmatprep.subr.bf16.mxu0 0
  %208 = vmatpush1.bf16.msra.mxu0 0
  %209 = vmatprep.subr.bf16.mxu0 0
  %210 = vmatpush1.bf16.msra.mxu0 0
  %211 = vmatprep.subr.bf16.mxu0 0
  %212 = vmatpush1.bf16.msra.mxu0 0
  %213 = vmatprep.subr.bf16.mxu0 0
  %214 = vmatpush1.bf16.msra.mxu0 0
  %215 = vmatprep.mubr.bf16.mxu0 0
  %216 = vmatmul.mubr.bf16.gmra.mrb[0].mxu0 %v119
  %v217 = vpop.f32.mrb[0].mxu0
  %v218 = vadd.f32 0.0, %v217
  %v219 = vpop.f32.mrb[0].mxu0
  %v220 = vpop.f32.mrb[0].mxu0
  %v221 = vadd.f32 0.0, %v220
  %v222 = vpop.f32.mrb[0].mxu0
  %223 = vmatprep.mubr.bf16.mxu0 0
  %224 = vmatmul.mubr.bf16.gmra.mrb[0].mxu0 %v120
  %v225 = vpop.f32.mrb[0].mxu0
  %v226 = vadd.f32 0.0, %v225
  %v227 = vpop.f32.mrb[0].mxu0
  %v228 = vpop.f32.mrb[0].mxu0
  %v229 = vadd.f32 0.0, %v228
  %v230 = vpop.f32.mrb[0].mxu0
  %231 = vmatprep.mubr.bf16.mxu0 0
  %232 = vmatmul.mubr.bf16.gmra.mrb[0].mxu0 %v121
  %v233 = vpop.f32.mrb[0].mxu0
  %v234 = vadd.f32 0.0, %v233
  %v235 = vpop.f32.mrb[0].mxu0
  %v236 = vpop.f32.mrb[0].mxu0
  %v237 = vadd.f32 0.0, %v236
  %v238 = vpop.f32.mrb[0].mxu0
  %239 = vmatprep.mubr.bf16.mxu0 0
  %240 = vmatmul.mubr.bf16.gmra.mrb[0].mxu0 %v122
  %v241 = vpop.f32.mrb[0].mxu0
  %v242 = vadd.f32 0.0, %v241
  %v243 = vpop.f32.mrb[0].mxu0
  %v244 = vpop.f32.mrb[0].mxu0
  %v245 = vadd.f32 0.0, %v244
  %v246 = vpop.f32.mrb[0].mxu0
  %247 = vmatprep.mubr.bf16.mxu0 0
  %248 = vmatmul.mubr.bf16.gmra.mrb[0].mxu0 %v123
  %v249 = vpop.f32.mrb[0].mxu0
  %v250 = vadd.f32 0.0, %v249
  %v251 = vpop.f32.mrb[0].mxu0
  %v252 = vpop.f32.mrb[0].mxu0
  %v253 = vadd.f32 0.0, %v252
  %v254 = vpop.f32.mrb[0].mxu0
  %255 = vmatprep.mubr.bf16.mxu0 0
  %256 = vmatmul.mubr.bf16.gmra.mrb[0].mxu0 %v124
  %v257 = vpop.f32.mrb[0].mxu0
  %v258 = vadd.f32 0.0, %v257
  %v259 = vpop.f32.mrb[0].mxu0
  %v260 = vpop.f32.mrb[0].mxu0
  %v261 = vadd.f32 0.0, %v260
  %v262 = vpop.f32.mrb[0].mxu0
  %263 = vmatprep.mubr.bf16.mxu0 0
  %264 = vmatmul.mubr.bf16.gmra.mrb[0].mxu0 %v125
  %v265 = vpop.f32.mrb[0].mxu0
  %v266 = vadd.f32 0.0, %v265
  %v267 = vpop.f32.mrb[0].mxu0
  %v268 = vpop.f32.mrb[0].mxu0
  %v269 = vadd.f32 0.0, %v268
  %v270 = vpop.f32.mrb[0].mxu0
  %271 = vmatprep.mubr.bf16.mxu0 0
  %272 = vmatmul.mubr.bf16.gmra.mrb[0].mxu0 %v126
  %v273 = vpop.f32.mrb[0].mxu0
  %v274 = vadd.f32 0.0, %v273
  %v275 = vpop.f32.mrb[0].mxu0
  %v276 = vpop.f32.mrb[0].mxu0
  %v277 = vadd.f32 0.0, %v276
  %v278 = vpop.f32.mrb[0].mxu0
  %279 = vdwg.mxu0
  %v280 = vadd.f32 %v39, %v218
  %v281 = vadd.f32 %v40, %v221
  %v282 = vadd.f32 %v41, %v226
  %v283 = vadd.f32 %v42, %v229
  %v284 = vadd.f32 %v43, %v234
  %v285 = vadd.f32 %v44, %v237
  %v286 = vadd.f32 %v45, %v242
  %v287 = vadd.f32 %v46, %v245
  %v288 = vadd.f32 %v47, %v250
  %v289 = vadd.f32 %v48, %v253
  %v290 = vadd.f32 %v49, %v258
  %v291 = vadd.f32 %v50, %v261
  %v292 = vadd.f32 %v51, %v266
  %v293 = vadd.f32 %v52, %v269
  %v294 = vadd.f32 %v53, %v274
  %v295 = vadd.f32 %v54, %v277
  %vm296 = vcmask 15360
  %297 = vst.msk [vmem:[#allocation2] sm:$0xff] %vm296, %v280
  %298 = vst.msk [vmem:[#allocation2 + $0x8] sm:$0xff] %vm296, %v281
  %299 = vst.msk [vmem:[#allocation2 + $0x10] sm:$0xff] %vm296, %v282
  %300 = vst.msk [vmem:[#allocation2 + $0x18] sm:$0xff] %vm296, %v283
  %301 = vst.msk [vmem:[#allocation2 + $0x20] sm:$0xff] %vm296, %v284
  %302 = vst.msk [vmem:[#allocation2 + $0x28] sm:$0xff] %vm296, %v285
  %303 = vst.msk [vmem:[#allocation2 + $0x30] sm:$0xff] %vm296, %v286
  %304 = vst.msk [vmem:[#allocation2 + $0x38] sm:$0xff] %vm296, %v287
  %305 = vst.msk [vmem:[#allocation2 + $0x40] sm:$0xff] %vm296, %v288
  %306 = vst.msk [vmem:[#allocation2 + $0x48] sm:$0xff] %vm296, %v289
  %307 = vst.msk [vmem:[#allocation2 + $0x50] sm:$0xff] %vm296, %v290
  %308 = vst.msk [vmem:[#allocation2 + $0x58] sm:$0xff] %vm296, %v291
  %309 = vst.msk [vmem:[#allocation2 + $0x60] sm:$0xff] %vm296, %v292
  %310 = vst.msk [vmem:[#allocation2 + $0x68] sm:$0xff] %vm296, %v293
  %311 = vst.msk [vmem:[#allocation2 + $0x70] sm:$0xff] %vm296, %v294
  %312 = vst.msk [vmem:[#allocation2 + $0x78] sm:$0xff] %vm296, %v295
  // Predicated region
  $region22: #{gcn_forward.2} parent=0 // pred_check
    %p313 = pneg %p18
  $region23: #{gcn_forward.2} parent=0 // pred_check_branch
    %315 = sbr.rel (%p313) target = $region25
  $region24: #{gcn_forward.2} parent=0 // pred_region
    %v316 = vld [vmem:[#allocation2] sm:$0xff]
    %v317 = vld [vmem:[#allocation2 + $0x8] sm:$0xff]
    %v318 = vld [vmem:[#allocation2 + $0x10] sm:$0xff]
    %v319 = vld [vmem:[#allocation2 + $0x18] sm:$0xff]
    %v320 = vld [vmem:[#allocation2 + $0x20] sm:$0xff]
    %v321 = vld [vmem:[#allocation2 + $0x28] sm:$0xff]
    %v322 = vld [vmem:[#allocation2 + $0x30] sm:$0xff]
    %v323 = vld [vmem:[#allocation2 + $0x38] sm:$0xff]
    %v324 = vld [vmem:[#allocation2 + $0x40] sm:$0xff]
    %v325 = vld [vmem:[#allocation2 + $0x48] sm:$0xff]
    %v326 = vld [vmem:[#allocation2 + $0x50] sm:$0xff]
    %v327 = vld [vmem:[#allocation2 + $0x58] sm:$0xff]
    %v328 = vld [vmem:[#allocation2 + $0x60] sm:$0xff]
    %v329 = vld [vmem:[#allocation2 + $0x68] sm:$0xff]
    %v330 = vld [vmem:[#allocation2 + $0x70] sm:$0xff]
    %v331 = vld [vmem:[#allocation2 + $0x78] sm:$0xff]
    %v332 = vld [vmem:[%s2] sm:$0x3]
    %v333 = vld [vmem:[%s3] sm:$0x1]
    %v335 = vlaneseq
    %v336 = vshrl.u32 %v335, 7
    %v337 = vsub.s32 0, %v336
    %v338 = vrot.slane %v333, %v337
    %v341 = vsel %vm296, %v316, 0
    %v344 = vsel %vm296, %v317, 0
    %v347 = vsel %vm296, %v318, 0
    %v350 = vsel %vm296, %v319, 0
    %v353 = vsel %vm296, %v320, 0
    %v356 = vsel %vm296, %v321, 0
    %v359 = vsel %vm296, %v322, 0
    %v362 = vsel %vm296, %v323, 0
    %v365 = vsel %vm296, %v324, 0
    %v368 = vsel %vm296, %v325, 0
    %v371 = vsel %vm296, %v326, 0
    %v374 = vsel %vm296, %v327, 0
    %v377 = vsel %vm296, %v328, 0
    %v380 = vsel %vm296, %v329, 0
    %v383 = vsel %vm296, %v330, 0
    %v386 = vsel %vm296, %v331, 0
    %vm388 = vcmask 1041408
    %v390 = vsel %vm388, %v332, 0
    %392 = vmatprep.subr.mxu0 0.0
    %393 = vmatpush1.msra.mxu0 %v390
    %394 = vmatprep.subr.mxu0 0.0
    %395 = vmatpush1.msra.mxu0 0.0
    %396 = vmatprep.subr.mxu0 0.0
    %397 = vmatpush1.msra.mxu0 0.0
    %398 = vmatprep.subr.mxu0 0.0
    %399 = vmatpush1.msra.mxu0 0.0
    %400 = vmatprep.subr.mxu0 0.0
    %401 = vmatpush1.msra.mxu0 0.0
    %402 = vmatprep.subr.mxu0 0.0
    %403 = vmatpush1.msra.mxu0 0.0
    %404 = vmatprep.subr.mxu0 0.0
    %405 = vmatpush1.msra.mxu0 0.0
    %406 = vmatprep.subr.mxu0 0.0
    %407 = vmatpush1.msra.mxu0 0.0
    %408 = vmatprep.subr.mxu0 0.0
    %409 = vmatpush1.msra.mxu0 0.0
    %410 = vmatprep.subr.mxu0 0.0
    %411 = vmatpush1.msra.mxu0 0.0
    %412 = vmatprep.subr.mxu0 0.0
    %413 = vmatpush1.msra.mxu0 0.0
    %414 = vmatprep.subr.mxu0 0.0
    %415 = vmatpush1.msra.mxu0 0.0
    %416 = vmatprep.subr.mxu0 0.0
    %417 = vmatpush1.msra.mxu0 0.0
    %418 = vmatprep.subr.mxu0 0.0
    %419 = vmatpush1.msra.mxu0 0.0
    %420 = vmatprep.subr.mxu0 0.0
    %421 = vmatpush1.msra.mxu0 0.0
    %422 = vmatprep.subr.mxu0 0.0
    %423 = vmatpush1.msra.mxu0 0.0
    %424 = vmatprep.subr.mxu0 0.0
    %425 = vmatpush1.msra.mxu0 0.0
    %426 = vmatprep.subr.mxu0 0.0
    %427 = vmatpush1.msra.mxu0 0.0
    %428 = vmatprep.subr.mxu0 0.0
    %429 = vmatpush1.msra.mxu0 0.0
    %430 = vmatprep.subr.mxu0 0.0
    %431 = vmatpush1.msra.mxu0 0.0
    %432 = vmatprep.subr.mxu0 0.0
    %433 = vmatpush1.msra.mxu0 0.0
    %434 = vmatprep.subr.mxu0 0.0
    %435 = vmatpush1.msra.mxu0 0.0
    %436 = vmatprep.subr.mxu0 0.0
    %437 = vmatpush1.msra.mxu0 0.0
    %438 = vmatprep.subr.mxu0 0.0
    %439 = vmatpush1.msra.mxu0 0.0
    %440 = vmatprep.subr.mxu0 0.0
    %441 = vmatpush1.msra.mxu0 0.0
    %442 = vmatprep.subr.mxu0 0.0
    %443 = vmatpush1.msra.mxu0 0.0
    %444 = vmatprep.subr.mxu0 0.0
    %445 = vmatpush1.msra.mxu0 0.0
    %446 = vmatprep.subr.mxu0 0.0
    %447 = vmatpush1.msra.mxu0 0.0
    %448 = vmatprep.subr.mxu0 0.0
    %449 = vmatpush1.msra.mxu0 0.0
    %450 = vmatprep.subr.mxu0 0.0
    %451 = vmatpush1.msra.mxu0 0.0
    %452 = vmatprep.subr.mxu0 0.0
    %453 = vmatpush1.msra.mxu0 0.0
    %454 = vmatprep.subr.mxu0 0.0
    %455 = vmatpush1.msra.mxu0 0.0
    %456 = vmatprep.mubr.f32.mxu0 0.0
    %457 = vmatmul.mubr.f32.gmra.mrb[0].mxu0 %v341
    %v458 = vpop.f32.mrb[0].mxu0
    %v459 = vadd.f32 %v338, %v458
    %v460 = vpop.f32.mrb[0].mxu0
    %461 = vmatprep.mubr.f32.mxu0 0.0
    %462 = vmatmul.mubr.f32.gmra.mrb[0].mxu0 %v344
    %v463 = vpop.f32.mrb[0].mxu0
    %v464 = vadd.f32 %v338, %v463
    %v465 = vpop.f32.mrb[0].mxu0
    %466 = vmatprep.mubr.f32.mxu0 0.0
    %467 = vmatmul.mubr.f32.gmra.mrb[0].mxu0 %v347
    %v468 = vpop.f32.mrb[0].mxu0
    %v469 = vadd.f32 %v338, %v468
    %v470 = vpop.f32.mrb[0].mxu0
    %471 = vmatprep.mubr.f32.mxu0 0.0
    %472 = vmatmul.mubr.f32.gmra.mrb[0].mxu0 %v350
    %v473 = vpop.f32.mrb[0].mxu0
    %v474 = vadd.f32 %v338, %v473
    %v475 = vpop.f32.mrb[0].mxu0
    %476 = vmatprep.mubr.f32.mxu0 0.0
    %477 = vmatmul.mubr.f32.gmra.mrb[0].mxu0 %v353
    %v478 = vpop.f32.mrb[0].mxu0
    %v479 = vadd.f32 %v338, %v478
    %v480 = vpop.f32.mrb[0].mxu0
    %481 = vmatprep.mubr.f32.mxu0 0.0
    %482 = vmatmul.mubr.f32.gmra.mrb[0].mxu0 %v356
    %v483 = vpop.f32.mrb[0].mxu0
    %v484 = vadd.f32 %v338, %v483
    %v485 = vpop.f32.mrb[0].mxu0
    %486 = vmatprep.mubr.f32.mxu0 0.0
    %487 = vmatmul.mubr.f32.gmra.mrb[0].mxu0 %v359
    %v488 = vpop.f32.mrb[0].mxu0
    %v489 = vadd.f32 %v338, %v488
    %v490 = vpop.f32.mrb[0].mxu0
    %491 = vmatprep.mubr.f32.mxu0 0.0
    %492 = vmatmul.mubr.f32.gmra.mrb[0].mxu0 %v362
    %v493 = vpop.f32.mrb[0].mxu0
    %v494 = vadd.f32 %v338, %v493
    %v495 = vpop.f32.mrb[0].mxu0
    %496 = vmatprep.mubr.f32.mxu0 0.0
    %497 = vmatmul.mubr.f32.gmra.mrb[0].mxu0 %v365
    %v498 = vpop.f32.mrb[0].mxu0
    %v499 = vadd.f32 %v338, %v498
    %v500 = vpop.f32.mrb[0].mxu0
    %501 = vmatprep.mubr.f32.mxu0 0.0
    %502 = vmatmul.mubr.f32.gmra.mrb[0].mxu0 %v368
    %v503 = vpop.f32.mrb[0].mxu0
    %v504 = vadd.f32 %v338, %v503
    %v505 = vpop.f32.mrb[0].mxu0
    %506 = vmatprep.mubr.f32.mxu0 0.0
    %507 = vmatmul.mubr.f32.gmra.mrb[0].mxu0 %v371
    %v508 = vpop.f32.mrb[0].mxu0
    %v509 = vadd.f32 %v338, %v508
    %v510 = vpop.f32.mrb[0].mxu0
    %511 = vmatprep.mubr.f32.mxu0 0.0
    %512 = vmatmul.mubr.f32.gmra.mrb[0].mxu0 %v374
    %v513 = vpop.f32.mrb[0].mxu0
    %v514 = vadd.f32 %v338, %v513
    %v515 = vpop.f32.mrb[0].mxu0
    %516 = vmatprep.mubr.f32.mxu0 0.0
    %517 = vmatmul.mubr.f32.gmra.mrb[0].mxu0 %v377
    %v518 = vpop.f32.mrb[0].mxu0
    %v519 = vadd.f32 %v338, %v518
    %v520 = vpop.f32.mrb[0].mxu0
    %521 = vmatprep.mubr.f32.mxu0 0.0
    %522 = vmatmul.mubr.f32.gmra.mrb[0].mxu0 %v380
    %v523 = vpop.f32.mrb[0].mxu0
    %v524 = vadd.f32 %v338, %v523
    %v525 = vpop.f32.mrb[0].mxu0
    %526 = vmatprep.mubr.f32.mxu0 0.0
    %527 = vmatmul.mubr.f32.gmra.mrb[0].mxu0 %v383
    %v528 = vpop.f32.mrb[0].mxu0
    %v529 = vadd.f32 %v338, %v528
    %v530 = vpop.f32.mrb[0].mxu0
    %531 = vmatprep.mubr.f32.mxu0 0.0
    %532 = vmatmul.mubr.f32.gmra.mrb[0].mxu0 %v386
    %v533 = vpop.f32.mrb[0].mxu0
    %v534 = vadd.f32 %v338, %v533
    %v535 = vpop.f32.mrb[0].mxu0
    %536 = vdwg.mxu0
    %537 = vst [vmem:[%s4] sm:$0xff] %v459
    %538 = vst [vmem:[%s4 + $0x8] sm:$0xff] %v464
    %539 = vst [vmem:[%s4 + $0x10] sm:$0xff] %v469
    %540 = vst [vmem:[%s4 + $0x18] sm:$0xff] %v474
    %541 = vst [vmem:[%s4 + $0x20] sm:$0xff] %v479
    %542 = vst [vmem:[%s4 + $0x28] sm:$0xff] %v484
    %543 = vst [vmem:[%s4 + $0x30] sm:$0xff] %v489
    %544 = vst [vmem:[%s4 + $0x38] sm:$0xff] %v494
    %545 = vst [vmem:[%s4 + $0x40] sm:$0xff] %v499
    %546 = vst [vmem:[%s4 + $0x48] sm:$0xff] %v504
    %547 = vst [vmem:[%s4 + $0x50] sm:$0xff] %v509
    %548 = vst [vmem:[%s4 + $0x58] sm:$0xff] %v514
    %549 = vst [vmem:[%s4 + $0x60] sm:$0xff] %v519
    %550 = vst [vmem:[%s4 + $0x68] sm:$0xff] %v524
    %551 = vst [vmem:[%s4 + $0x70] sm:$0xff] %v529
    %552 = vst [vmem:[%s4 + $0x78] sm:$0xff] %v534
  $region25: #{gcn_forward.2} parent=0 // pred_fallthru
    _
  // Predicated region
  $region26: #{gcn_forward.2} parent=0 // pred_check
    _
  $region27: #{gcn_forward.2} parent=0 // pred_check_branch
    %554 = sbr.rel (0) target = $region29
  $region28: #{gcn_forward.2} parent=0 // pred_region
    _
  $region29: #{gcn_forward.2} parent=0 // pred_fallthru
    _
  // Predicated region
  $region30: #{gcn_forward.2} parent=0 // pred_check
    _
  $region31: #{gcn_forward.2} parent=0 // pred_check_branch
    %556 = sbr.rel (0) target = $region33
  $region32: #{gcn_forward.2} parent=0 // pred_region
    _
  $region33: #{gcn_forward.2} parent=0 // pred_fallthru
    _

</llo_original>
